<compile_context>
chip_gen: v5e
topology: v5e:2x2
jax: 0.10.0
libtpu: 0.0.40
codegen_flags: <defaults>
</compile_context>

<pallas_src>
import functools

import jax
import jax.numpy as jnp
from jax.experimental import pallas as pl
from jax.experimental.pallas import tpu as pltpu


def _round_up(x, m):
    return (x + m - 1) // m * m


def _cdiv(a, b):
    return (a + b - 1) // b


def _mlp_kernel(x_ref, w1_ref, b1_ref, w2_ref, b2_ref, w3_ref, b3_ref,
                o_ref, acc_ref):
    # x_ref : [TB, TK]   f32  (cast to bf16 in-kernel)
    # w1_ref: [TK, 512]  bf16 (K-chunk of layer-1 weights)
    # w2_ref: [512, 128] bf16, w3_ref: [128, Np] bf16 (VMEM-resident)
    # b*_ref: [1, n]     f32
    # o_ref : [TB, Np]   f32  (lane-dense padded output tile)
    # acc_ref:[TB, 512]  f32  layer-1 accumulator, persists across the K axis
    k = pl.program_id(1)

    x = x_ref[...].astype(jnp.bfloat16)                  # VPU cast, no extra HBM pass
    part = jnp.dot(x, w1_ref[...], preferred_element_type=jnp.float32)

    @pl.when(k == 0)
    def _():
        acc_ref[...] = part

    @pl.when(k > 0)
    def _():
        acc_ref[...] += part

    @pl.when(k == pl.num_programs(1) - 1)
    def _():
        h1 = jnp.maximum(acc_ref[...] + b1_ref[...], 0.0).astype(jnp.bfloat16)
        h2 = jnp.dot(h1, w2_ref[...], preferred_element_type=jnp.float32) + b2_ref[...]
        h2 = jnp.maximum(h2, 0.0).astype(jnp.bfloat16)
        out = jnp.dot(h2, w3_ref[...], preferred_element_type=jnp.float32) + b3_ref[...]
        o_ref[...] = out.astype(o_ref.dtype)             # (TB, Np) unmasked lane-dense store


def _select_config(B, d_in, n_out_pad):
    """Pick (tb, tk, vmem_limit) from problem sizes and the chip's VMEM capacity."""
    try:
        vmem_cap = int(pltpu.get_tpu_info().vmem_capacity_bytes)
    except Exception:
        vmem_cap = 64 * 1024 * 1024                      # v7x is the smallest generation
    budget = int(vmem_cap * 0.75)                        # headroom for compiler scratch

    # Batch tile: multiple of 8; cdiv(B, 2) guarantees >= 2 grid steps whenever B
    # allows it so the 'parallel' batch axis shards across both v7x TensorCores.
    tb_cap = 512 if vmem_cap >= 96 * 1024 * 1024 else 256   # v5e/v6e (128 MiB) vs v7x (64 MiB)
    tb = min(tb_cap, _round_up(max(_cdiv(B, 2), 8), 8))

    # K chunk for the layer-1 matmul.  VMEM cost not proportional to tk:
    fixed = (2 * tb * n_out_pad * 4                      # out tile, 2 bufs, f32
             + tb * 512 * 4                              # layer-1 accumulator
             + 2 * (512 * 128 + 128 * n_out_pad) * 2     # w2 / w3 (2 bufs, bf16)
             + tb * (512 + 128) * 6                      # h1/h2 staging, rough
             + (2 << 20))                                # biases / misc slack
    per_tk = 2 * tb * 4 + 2 * 512 * 2                    # x tile (f32, 2 bufs) + w1 chunk (bf16, 2 bufs)
    max_tk = max(128, (budget - fixed) // per_tk)

    if d_in <= max_tk:
        tk = d_in                                        # single K step (common case)
    else:
        tk = None
        for n_k in range(2, d_in // 128 + 1):            # largest mult-of-128 divisor that fits
            cand = d_in // n_k
            if d_in % n_k == 0 and cand % 128 == 0 and cand <= max_tk:
                tk = cand
                break
        if tk is None:
            # TODO(synk): pad d_in to a multiple of 128 to enable K-tiling when d_in
            # has no suitable divisor; fall back to a single K chunk for now.
            tk = d_in

    est = (2 * (tk * 512 * 2)                            # w1 chunk
           + 2 * (512 * 128 + 128 * n_out_pad) * 2       # w2 / w3
           + 2 * tb * tk * 4                             # x tile
           + 2 * tb * n_out_pad * 4                      # out tile
           + tb * 512 * 4                                # accumulator
           + tb * (512 + 128) * 6)                       # staging
    vmem_limit = min(int(vmem_cap * 0.9), max(2 * est, 32 * 1024 * 1024))
    return tb, tk, int(vmem_limit)


def mlp_forward(x_flat, kernel_params, out_features):
    """Fused 3-layer MLP.

    x_flat: [B, D_in] float32 (fed to the kernel as-is; cast happens on-chip).
    kernel_params: (w1,b1,w2,b2,w3_pad,b3_pad) — weights bf16 [in,out], biases f32
                   [1,out], last layer pre-padded to a 128-wide lane-dense output.
    Returns [B, out_features] float32.
    """
    w1, b1, w2, b2, w3p, b3p = kernel_params
    B, d_in = x_flat.shape
    n_out_pad = w3p.shape[1]                             # multiple of 128

    # Only tiny batches get padded (to one 8-row sublane tile); larger batches rely
    # on Pallas' partial-tile clamping for the last block (rows are independent).
    b_eff = B
    if B < 8:
        x_flat = jnp.pad(x_flat, ((0, 8 - B), (0, 0)))
        b_eff = 8

    tb, tk, vmem_limit = _select_config(b_eff, d_in, n_out_pad)
    grid = (_cdiv(b_eff, tb), d_in // tk)                # tk always divides d_in

    out = pl.pallas_call(
        _mlp_kernel,
        out_shape=jax.ShapeDtypeStruct((b_eff, n_out_pad), jnp.float32),
        grid=grid,
        in_specs=[
            pl.BlockSpec((tb, tk), lambda i, k: (i, k)),     # x: streamed f32 tiles
            pl.BlockSpec((tk, 512), lambda i, k: (k, 0)),    # w1: streamed K-chunks
            pl.BlockSpec(b1.shape, lambda i, k: (0, 0)),     # resident
            pl.BlockSpec(w2.shape, lambda i, k: (0, 0)),
            pl.BlockSpec(b2.shape, lambda i, k: (0, 0)),
            pl.BlockSpec(w3p.shape, lambda i, k: (0, 0)),
            pl.BlockSpec(b3p.shape, lambda i, k: (0, 0)),
        ],
        out_specs=pl.BlockSpec((tb, n_out_pad), lambda i, k: (i, 0)),
        scratch_shapes=[pltpu.VMEM((tb, 512), jnp.float32)],
        compiler_params=pltpu.CompilerParams(
            dimension_semantics=("parallel", "arbitrary"),
            vmem_limit_bytes=vmem_limit,
        ),
    )(x_flat, w1, b1, w2, b2, w3p, b3p)

    return out[:B, :out_features]


def init_params(key, in_features, out_features):
    """f32 params matching nn.Linear default U(-1/sqrt(fan_in), +1/sqrt(fan_in)).

    Weights stored pre-transposed as [in, out] so the kernel computes x @ W.
    """
    dims = [(in_features, 512), (512, 128), (128, out_features)]
    params = []
    for (d_in, d_out) in dims:
        key, kw, kb = jax.random.split(key, 3)
        bound = 1.0 / jnp.sqrt(jnp.float32(d_in))
        w = jax.random.uniform(kw, (d_in, d_out), jnp.float32, -bound, bound)
        b = jax.random.uniform(kb, (1, d_out), jnp.float32, -bound, bound)
        params += [w, b]
    return tuple(params)


def prepare_kernel_params(params):
    """Cast weights to bf16 and zero-pad layer 3 to a 128-wide (lane-dense) output."""
    w1, b1, w2, b2, w3, b3 = params
    out_features = w3.shape[1]
    n_out_pad = _round_up(out_features, 128)
    pad = n_out_pad - out_features
    w3p = jnp.pad(w3, ((0, 0), (0, pad)))
    b3p = jnp.pad(b3, ((0, 0), (0, pad)))
    return (
        w1.astype(jnp.bfloat16), b1.astype(jnp.float32),
        w2.astype(jnp.bfloat16), b2.astype(jnp.float32),
        w3p.astype(jnp.bfloat16), b3p.astype(jnp.float32),
    )


@functools.partial(jax.jit, static_argnums=(2,))
def neural_network_basic(state_nchw, kernel_params, out_features):
    """Mirrors NeuralNetworkBasic.forward: flatten then fused MLP kernel."""
    B = state_nchw.shape[0]
    x_flat = state_nchw.reshape(B, -1).astype(jnp.float32)   # flatten(state); reshape is free
    return mlp_forward(x_flat, kernel_params, out_features)


if __name__ == "__main__":
    key = jax.random.PRNGKey(0)
    k_in, k_par = jax.random.split(key)

    # Small shapes: state [2, 4, 4, 4]  =>  in_channels[0] = 64, out_channels = 16
    B, C, H, W = 2, 4, 4, 4
    in_features = C * H * W
    out_features = 16

    state = jax.random.normal(k_in, (B, C, H, W), jnp.float32)
    params_f32 = init_params(k_par, in_features, out_features)
    kparams = prepare_kernel_params(params_f32)

    out = neural_network_basic(state, kparams, out_features)
    jax.block_until_ready(out)

    # Pure-JAX reference mirroring the kernel's bf16-input / f32-accumulate precision.
    w1, b1, w2, b2, w3, b3 = params_f32
    bf = lambda a: a.astype(jnp.bfloat16).astype(jnp.float32)
    xf = bf(state.reshape(B, -1))
    ref = jnp.maximum(xf @ bf(w1) + b1, 0.0)
    ref = jnp.maximum(bf(ref) @ bf(w2) + b2, 0.0)
    ref = bf(ref) @ bf(w3) + b3

    assert out.shape == (B, out_features)
    assert jnp.allclose(out, ref, atol=5e-3, rtol=5e-3), (
        float(jnp.max(jnp.abs(out - ref))))

    print("KERNEL_OK")
</pallas_src>

<mosaic_0001>
module attributes {stable_mosaic.version = 11 : i64} {
  func.func @_mlp_kernel(%arg0: i32, %arg1: i32, %arg2: memref<8x64xf32, #tpu.memory_space<vmem>>, %arg3: memref<64x512xbf16, #tpu.memory_space<vmem>>, %arg4: memref<1x512xf32, #tpu.memory_space<vmem>>, %arg5: memref<512x128xbf16, #tpu.memory_space<vmem>>, %arg6: memref<1x128xf32, #tpu.memory_space<vmem>>, %arg7: memref<128x128xbf16, #tpu.memory_space<vmem>>, %arg8: memref<1x128xf32, #tpu.memory_space<vmem>>, %arg9: memref<8x128xf32, #tpu.memory_space<vmem>>, %arg10: memref<8x512xf32, #tpu.memory_space<vmem>>) attributes {dimension_semantics = [#tpu.dimension_semantics<parallel>, #tpu.dimension_semantics<arbitrary>], iteration_bounds = array<i64: 1, 1>, scalar_prefetch = 0 : i64, scratch_operands = 1 : i64, tpu.core_type = #tpu.core_type<tc>, window_params = [{transform_indices = @transform_0, window_bounds = array<i64: 8, 64>}, {transform_indices = @transform_1, window_bounds = array<i64: 64, 512>}, {pipeline_mode = #tpu.pipeline_mode<synchronous>, transform_indices = @transform_2, window_bounds = array<i64: 1, 512>}, {pipeline_mode = #tpu.pipeline_mode<synchronous>, transform_indices = @transform_3, window_bounds = array<i64: 512, 128>}, {pipeline_mode = #tpu.pipeline_mode<synchronous>, transform_indices = @transform_4, window_bounds = array<i64: 1, 128>}, {pipeline_mode = #tpu.pipeline_mode<synchronous>, transform_indices = @transform_5, window_bounds = array<i64: 128, 128>}, {pipeline_mode = #tpu.pipeline_mode<synchronous>, transform_indices = @transform_6, window_bounds = array<i64: 1, 128>}, {transform_indices = @transform_7, window_bounds = array<i64: 8, 128>}]} {
    %c0 = arith.constant 0 : index
    %c0_0 = arith.constant 0 : index
    %0 = vector.load %arg2[%c0, %c0_0] : memref<8x64xf32, #tpu.memory_space<vmem>>, vector<8x64xf32>
    %1 = arith.truncf %0 : vector<8x64xf32> to vector<8x64xbf16>
    %c0_1 = arith.constant 0 : index
    %c0_2 = arith.constant 0 : index
    %2 = vector.load %arg3[%c0_1, %c0_2] : memref<64x512xbf16, #tpu.memory_space<vmem>>, vector<64x512xbf16>
    %cst = arith.constant dense<0.000000e+00> : vector<8x512xf32>
    %3 = tpu.matmul %1, %2, %cst {dimension_numbers = #tpu.dot_dimension_numbers<[1], [0], [0], [1], [0, 0, 1, 1], [], []>} : vector<8x64xbf16>, vector<64x512xbf16>, vector<8x512xf32> -> vector<8x512xf32>
    %c0_i32 = arith.constant 0 : i32
    %4 = arith.cmpi eq, %arg1, %c0_i32 : i32
    %5 = arith.extui %4 : i1 to i32
    %c0_i32_3 = arith.constant 0 : i32
    %6 = arith.cmpi ne, %5, %c0_i32_3 : i32
    scf.if %6 {
      %c0_8 = arith.constant 0 : index
      %c0_9 = arith.constant 0 : index
      %13 = vector.load %arg10[%c0_8, %c0_9] : memref<8x512xf32, #tpu.memory_space<vmem>>, vector<8x512xf32>
      tpu.vector_store %arg10[%c0_8, %c0_9], %3 {strides = array<i32>} : memref<8x512xf32, #tpu.memory_space<vmem>>, vector<8x512xf32>,
    } else {
    }
    %c0_i32_4 = arith.constant 0 : i32
    %7 = arith.cmpi sgt, %arg1, %c0_i32_4 : i32
    %8 = arith.extui %7 : i1 to i32
    %c0_i32_5 = arith.constant 0 : i32
    %9 = arith.cmpi ne, %8, %c0_i32_5 : i32
    scf.if %9 {
      %c0_8 = arith.constant 0 : index
      %c0_9 = arith.constant 0 : index
      %13 = vector.load %arg10[%c0_8, %c0_9] : memref<8x512xf32, #tpu.memory_space<vmem>>, vector<8x512xf32>
      %14 = arith.addf %13, %3 : vector<8x512xf32>
      %c0_10 = arith.constant 0 : index
      %c0_11 = arith.constant 0 : index
      %15 = vector.load %arg10[%c0_10, %c0_11] : memref<8x512xf32, #tpu.memory_space<vmem>>, vector<8x512xf32>
      tpu.vector_store %arg10[%c0_10, %c0_11], %14 {strides = array<i32>} : memref<8x512xf32, #tpu.memory_space<vmem>>, vector<8x512xf32>,
    } else {
    }
    %c0_i32_6 = arith.constant 0 : i32
    %10 = arith.cmpi eq, %arg1, %c0_i32_6 : i32
    %11 = arith.extui %10 : i1 to i32
    %c0_i32_7 = arith.constant 0 : i32
    %12 = arith.cmpi ne, %11, %c0_i32_7 : i32
    scf.if %12 {
      %c0_8 = arith.constant 0 : index
      %c0_9 = arith.constant 0 : index
      %13 = vector.load %arg10[%c0_8, %c0_9] : memref<8x512xf32, #tpu.memory_space<vmem>>, vector<8x512xf32>
      %c0_10 = arith.constant 0 : index
      %c0_11 = arith.constant 0 : index
      %14 = vector.load %arg4[%c0_10, %c0_11] : memref<1x512xf32, #tpu.memory_space<vmem>>, vector<1x512xf32>
      %15 = vector.broadcast %14 : vector<1x512xf32> to vector<8x512xf32>
      %16 = arith.addf %13, %15 : vector<8x512xf32>
      %cst_12 = arith.constant 0.000000e+00 : f32
      %17 = vector.broadcast %cst_12 : f32 to vector<8x512xf32>
      %18 = arith.maximumf %16, %17 : vector<8x512xf32>
      %19 = arith.truncf %18 : vector<8x512xf32> to vector<8x512xbf16>
      %c0_13 = arith.constant 0 : index
      %c0_14 = arith.constant 0 : index
      %20 = vector.load %arg5[%c0_13, %c0_14] : memref<512x128xbf16, #tpu.memory_space<vmem>>, vector<512x128xbf16>
      %cst_15 = arith.constant dense<0.000000e+00> : vector<8x128xf32>
      %21 = tpu.matmul %19, %20, %cst_15 {dimension_numbers = #tpu.dot_dimension_numbers<[1], [0], [0], [1], [0, 0, 1, 1], [], []>} : vector<8x512xbf16>, vector<512x128xbf16>, vector<8x128xf32> -> vector<8x128xf32>
      %c0_16 = arith.constant 0 : index
      %c0_17 = arith.constant 0 : index
      %22 = vector.load %arg6[%c0_16, %c0_17] : memref<1x128xf32, #tpu.memory_space<vmem>>, vector<1x128xf32>
      %23 = vector.broadcast %22 : vector<1x128xf32> to vector<8x128xf32>
      %24 = arith.addf %21, %23 : vector<8x128xf32>
      %cst_18 = arith.constant 0.000000e+00 : f32
      %25 = vector.broadcast %cst_18 : f32 to vector<8x128xf32>
      %26 = arith.maximumf %24, %25 : vector<8x128xf32>
      %27 = arith.truncf %26 : vector<8x128xf32> to vector<8x128xbf16>
      %c0_19 = arith.constant 0 : index
      %c0_20 = arith.constant 0 : index
      %28 = vector.load %arg7[%c0_19, %c0_20] : memref<128x128xbf16, #tpu.memory_space<vmem>>, vector<128x128xbf16>
      %cst_21 = arith.constant dense<0.000000e+00> : vector<8x128xf32>
      %29 = tpu.matmul %27, %28, %cst_21 {dimension_numbers = #tpu.dot_dimension_numbers<[1], [0], [0], [1], [0, 0, 1, 1], [], []>} : vector<8x128xbf16>, vector<128x128xbf16>, vector<8x128xf32> -> vector<8x128xf32>
      %c0_22 = arith.constant 0 : index
      %c0_23 = arith.constant 0 : index
      %30 = vector.load %arg8[%c0_22, %c0_23] : memref<1x128xf32, #tpu.memory_space<vmem>>, vector<1x128xf32>
      %31 = vector.broadcast %30 : vector<1x128xf32> to vector<8x128xf32>
      %32 = arith.addf %29, %31 : vector<8x128xf32>
      %c0_24 = arith.constant 0 : index
      %c0_25 = arith.constant 0 : index
      %33 = vector.load %arg9[%c0_24, %c0_25] : memref<8x128xf32, #tpu.memory_space<vmem>>, vector<8x128xf32>
      tpu.vector_store %arg9[%c0_24, %c0_25], %32 {strides = array<i32>} : memref<8x128xf32, #tpu.memory_space<vmem>>, vector<8x128xf32>,
    } else {
    }
    return
  }
  func.func @transform_0(%arg0: i32, %arg1: i32) -> (i32, i32) {
    %c0_i32 = arith.constant 0 : i32
    return %arg0, %arg1 : i32, i32
  }
  func.func @transform_1(%arg0: i32, %arg1: i32) -> (i32, i32) {
    %c0_i32 = arith.constant 0 : i32
    %c0_i32_0 = arith.constant 0 : i32
    return %arg1, %c0_i32 : i32, i32
  }
  func.func @transform_2(%arg0: i32, %arg1: i32) -> (i32, i32) {
    %c0_i32 = arith.constant 0 : i32
    %c0_i32_0 = arith.constant 0 : i32
    %c0_i32_1 = arith.constant 0 : i32
    return %c0_i32, %c0_i32_0 : i32, i32
  }
  func.func @transform_3(%arg0: i32, %arg1: i32) -> (i32, i32) {
    %c0_i32 = arith.constant 0 : i32
    %c0_i32_0 = arith.constant 0 : i32
    %c0_i32_1 = arith.constant 0 : i32
    return %c0_i32, %c0_i32_0 : i32, i32
  }
  func.func @transform_4(%arg0: i32, %arg1: i32) -> (i32, i32) {
    %c0_i32 = arith.constant 0 : i32
    %c0_i32_0 = arith.constant 0 : i32
    %c0_i32_1 = arith.constant 0 : i32
    return %c0_i32, %c0_i32_0 : i32, i32
  }
  func.func @transform_5(%arg0: i32, %arg1: i32) -> (i32, i32) {
    %c0_i32 = arith.constant 0 : i32
    %c0_i32_0 = arith.constant 0 : i32
    %c0_i32_1 = arith.constant 0 : i32
    return %c0_i32, %c0_i32_0 : i32, i32
  }
  func.func @transform_6(%arg0: i32, %arg1: i32) -> (i32, i32) {
    %c0_i32 = arith.constant 0 : i32
    %c0_i32_0 = arith.constant 0 : i32
    %c0_i32_1 = arith.constant 0 : i32
    return %c0_i32, %c0_i32_0 : i32, i32
  }
  func.func @transform_7(%arg0: i32, %arg1: i32) -> (i32, i32) {
    %c0_i32 = arith.constant 0 : i32
    %c0_i32_0 = arith.constant 0 : i32
    return %arg0, %c0_i32 : i32, i32
  }
}

</mosaic_0001>

<llo_original>
// kernel: neural_network_basic.1
$region0: #{neural_network_basic.1}
  #allocation0 [shape = 'u32[]', space=smem, size = 0x4, offset = 0x4, fixed_abs, tag = 'smem constant byte address 0x4 - core index']
  #allocation1 [shape = 'u32[72,128]{1,0:T(1,128)}', space=vmem, size = 0x9000, scoped, tag = 'internal scratch']
  #allocation2 [shape = 'f32[8,512]{1,0:T(8,128)}', space=vmem, size = 0x4000, scoped, tag = 'scratch operand']
  %s0 = inlined_call_operand.vmem [shape: f32[8,64], index: 0, kind: input, shape index: {}]
  %s1 = inlined_call_operand.hbm [shape: bf16[64,512], index: 1, kind: input, shape index: {}]
  %s2 = inlined_call_operand.vmem [shape: f32[1,512], index: 2, kind: input, shape index: {}]
  %s3 = inlined_call_operand.hbm [shape: bf16[512,128], index: 3, kind: input, shape index: {}]
  %s4 = inlined_call_operand.vmem [shape: f32[1,128], index: 4, kind: input, shape index: {}]
  %s5 = inlined_call_operand.hbm [shape: bf16[128,128], index: 5, kind: input, shape index: {}]
  %s6 = inlined_call_operand.vmem [shape: f32[1,128], index: 6, kind: input, shape index: {}]
  %s7 = inlined_call_operand.vmem [shape: f32[8,128], index: 7, kind: output, shape index: {}]
  %s8 = sld [smem:[#allocation0]]
  $region62: #{neural_network_basic.1} parent=0
    _
  %s10 = ssub.s32 1, %s8
  %s11 = scalar_select 0, %s10, %s8
  $region1: #{neural_network_basic.1} parent=0
    #allocation3 [shape = 'u8[65536]{0}', space=vmem, size = 0x10000, scoped, tag = 'input window, operand 1, single buffered']
    #allocation4 [shape = 's32[1]{0}', space=sflag, size = 0x4, scoped, tag = 'scoped memory for neural_network_basic.1']
    #allocation5 [shape = 'u8[131072]{0}', space=vmem, size = 0x20000, scoped, tag = 'input window, operand 3, single buffered']
    #allocation6 [shape = 's32[1]{0}', space=sflag, size = 0x4, scoped, tag = 'scoped memory for neural_network_basic.1']
    #allocation7 [shape = 'u8[32768]{0}', space=vmem, size = 0x8000, scoped, tag = 'input window, operand 5, single buffered']
    %12 = vsyncpa [#allocation4], 0
    %13 = vsyncpa [#allocation6], 0
    // Predicated region
    $region2: #{neural_network_basic.1} parent=1 // pred_check
      _
    $region3: #{neural_network_basic.1} parent=1 // pred_check_branch
      %15 = sbr.rel (0) target = $region5
    $region4: #{neural_network_basic.1} parent=1 // pred_region
      _
    $region5: #{neural_network_basic.1} parent=1 // pred_fallthru
      _
    // Predicated region
    $region6: #{neural_network_basic.1} parent=1 // pred_check
      _
    $region7: #{neural_network_basic.1} parent=1 // pred_check_branch
      %17 = sbr.rel (0) target = $region9
    $region8: #{neural_network_basic.1} parent=1 // pred_region
      %19 = vsyncadd [#allocation4], 0
      %s20 = sshll.u32 %s1, 4
      %s21 = int_to_ptr.hbm [resolvable:$true] %s20
      %s22 = sshll.u32 [#allocation3], 4
      %s23 = int_to_ptr.vmem [resolvable:$true] %s22
      %28 = dma.hbm_to_vmem [thread:$0]  %s21, 2048, %s23, [#allocation4], 256, 256, 16
    $region9: #{neural_network_basic.1} parent=1 // pred_fallthru
      _
    // Predicated region
    $region10: #{neural_network_basic.1} parent=1 // pred_check
      _
    $region11: #{neural_network_basic.1} parent=1 // pred_check_branch
      %30 = sbr.rel (0) target = $region13
    $region12: #{neural_network_basic.1} parent=1 // pred_region
      _
    $region13: #{neural_network_basic.1} parent=1 // pred_fallthru
      _
    // Predicated region
    $region14: #{neural_network_basic.1} parent=1 // pred_check
      _
    $region15: #{neural_network_basic.1} parent=1 // pred_check_branch
      %32 = sbr.rel (0) target = $region17
    $region16: #{neural_network_basic.1} parent=1 // pred_region
      %34 = vsyncadd [#allocation6], 0
      %s35 = sshll.u32 %s3, 4
      %s36 = int_to_ptr.hbm [resolvable:$true] %s35
      %s37 = sshll.u32 [#allocation5], 4
      %s38 = int_to_ptr.vmem [resolvable:$true] %s37
      %43 = dma.hbm_to_vmem [thread:$0]  %s36, 4096, %s38, [#allocation6], 64, 64, 4
    $region17: #{neural_network_basic.1} parent=1 // pred_fallthru
      _
    // Predicated region
    $region18: #{neural_network_basic.1} parent=1 // pred_check
      _
    $region19: #{neural_network_basic.1} parent=1 // pred_check_branch
      %45 = sbr.rel (0) target = $region21
    $region20: #{neural_network_basic.1} parent=1 // pred_region
      _
    $region21: #{neural_network_basic.1} parent=1 // pred_fallthru
      _
    // Predicated region
    $region22: #{neural_network_basic.1} parent=1 // pred_check
      _
    $region23: #{neural_network_basic.1} parent=1 // pred_check_branch
      %47 = sbr.rel (0) target = $region25
    $region24: #{neural_network_basic.1} parent=1 // pred_region
      %49 = vsyncadd [#allocation6], 0
      %s50 = sshll.u32 %s5, 4
      %s51 = int_to_ptr.hbm [resolvable:$true] %s50
      %s52 = sshll.u32 [#allocation7], 4
      %s53 = int_to_ptr.vmem [resolvable:$true] %s52
      %58 = dma.hbm_to_vmem [thread:$0]  %s51, 1024, %s53, [#allocation6], 64, 64, 4
    $region25: #{neural_network_basic.1} parent=1 // pred_fallthru
      _
    // Predicated region
    $region26: #{neural_network_basic.1} parent=1 // pred_check
      _
    $region27: #{neural_network_basic.1} parent=1 // pred_check_branch
      %60 = sbr.rel (0) target = $region29
    $region28: #{neural_network_basic.1} parent=1 // pred_region
      _
    $region29: #{neural_network_basic.1} parent=1 // pred_fallthru
      _
    // Predicated region
    $region30: #{neural_network_basic.1} parent=1 // pred_check
      _
    $region31: #{neural_network_basic.1} parent=1 // pred_check_branch
      %62 = sbr.rel (0) target = $region33
    $region32: #{neural_network_basic.1} parent=1 // pred_region
      %64 = dma.done [#allocation4], 2048
    $region33: #{neural_network_basic.1} parent=1 // pred_fallthru
      _
    // Predicated region
    $region34: #{neural_network_basic.1} parent=1 // pred_check
      _
    $region35: #{neural_network_basic.1} parent=1 // pred_check_branch
      %66 = sbr.rel (0) target = $region37
    $region36: #{neural_network_basic.1} parent=1 // pred_region
      %68 = dma.done [#allocation6], 4096
    $region37: #{neural_network_basic.1} parent=1 // pred_fallthru
      _
    // Predicated region
    $region38: #{neural_network_basic.1} parent=1 // pred_check
      _
    $region39: #{neural_network_basic.1} parent=1 // pred_check_branch
      %70 = sbr.rel (0) target = $region41
    $region40: #{neural_network_basic.1} parent=1 // pred_region
      %72 = dma.done [#allocation6], 1024
    $region41: #{neural_network_basic.1} parent=1 // pred_fallthru
      _
    %v74 = vld [vmem:[%s0] sm:$0xff]
    %v75 = vpack.c.bf16 %v74, %v74
    %v76 = vld [vmem:[#allocation3] sm:$0xff]
    %v77 = vld [vmem:[#allocation3 + $0x8] sm:$0xff]
    %v78 = vld [vmem:[#allocation3 + $0x10] sm:$0xff]
    %v79 = vld [vmem:[#allocation3 + $0x18] sm:$0xff]
    %v80 = vld [vmem:[#allocation3 + $0x20] sm:$0xff]
    %v81 = vld [vmem:[#allocation3 + $0x28] sm:$0xff]
    %v82 = vld [vmem:[#allocation3 + $0x30] sm:$0xff]
    %v83 = vld [vmem:[#allocation3 + $0x38] sm:$0xff]
    %v84 = vld [vmem:[#allocation3 + $0x40] sm:$0xff]
    %v85 = vld [vmem:[#allocation3 + $0x48] sm:$0xff]
    %v86 = vld [vmem:[#allocation3 + $0x50] sm:$0xff]
    %v87 = vld [vmem:[#allocation3 + $0x58] sm:$0xff]
    %v88 = vld [vmem:[#allocation3 + $0x60] sm:$0xff]
    %v89 = vld [vmem:[#allocation3 + $0x68] sm:$0xff]
    %v90 = vld [vmem:[#allocation3 + $0x70] sm:$0xff]
    %v91 = vld [vmem:[#allocation3 + $0x78] sm:$0xff]
    %v108 = vunpack.c.l.b16 %v76
    %v109 = vunpack.c.h.b16 %v76
    %v110 = vunpack.c.l.b16 %v77
    %v111 = vunpack.c.h.b16 %v77
    %v112 = vunpack.c.l.b16 %v78
    %v113 = vunpack.c.h.b16 %v78
    %v114 = vunpack.c.l.b16 %v79
    %v115 = vunpack.c.h.b16 %v79
    %v116 = vunpack.c.l.b16 %v80
    %v117 = vunpack.c.h.b16 %v80
    %v118 = vunpack.c.l.b16 %v81
    %v119 = vunpack.c.h.b16 %v81
    %v120 = vunpack.c.l.b16 %v82
    %v121 = vunpack.c.h.b16 %v82
    %v122 = vunpack.c.l.b16 %v83
    %v123 = vunpack.c.h.b16 %v83
    %v124 = vunpack.c.l.b16 %v84
    %v125 = vunpack.c.h.b16 %v84
    %v126 = vunpack.c.l.b16 %v85
    %v127 = vunpack.c.h.b16 %v85
    %v128 = vunpack.c.l.b16 %v86
    %v129 = vunpack.c.h.b16 %v86
    %v130 = vunpack.c.l.b16 %v87
    %v131 = vunpack.c.h.b16 %v87
    %v132 = vunpack.c.l.b16 %v88
    %v133 = vunpack.c.h.b16 %v88
    %v134 = vunpack.c.l.b16 %v89
    %v135 = vunpack.c.h.b16 %v89
    %v136 = vunpack.c.l.b16 %v90
    %v137 = vunpack.c.h.b16 %v90
    %v138 = vunpack.c.l.b16 %v91
    %v139 = vunpack.c.h.b16 %v91
    %v140 = vpack.c.b16 %v112, %v108
    %v141 = vpack.c.b16 %v113, %v109
    %v142 = vpack.c.b16 %v114, %v110
    %v143 = vpack.c.b16 %v115, %v111
    %v144 = vpack.c.b16 %v120, %v116
    %v145 = vpack.c.b16 %v121, %v117
    %v146 = vpack.c.b16 %v122, %v118
    %v147 = vpack.c.b16 %v123, %v119
    %v148 = vpack.c.b16 %v128, %v124
    %v149 = vpack.c.b16 %v129, %v125
    %v150 = vpack.c.b16 %v130, %v126
    %v151 = vpack.c.b16 %v131, %v127
    %v152 = vpack.c.b16 %v136, %v132
    %v153 = vpack.c.b16 %v137, %v133
    %v154 = vpack.c.b16 %v138, %v134
    %v155 = vpack.c.b16 %v139, %v135
    %vm172 = vcmask 523264
    %v174 = vsel %vm172, %v75, 0
    %176 = vmatpush.bf16.msra.mxu0 0
    %177 = vmatpush.bf16.msra.mxu0 0
    %178 = vmatpush.bf16.msra.mxu0 0
    %179 = vmatpush.bf16.msra.mxu0 0
    %180 = vmatpush.bf16.msra.mxu0 %v152
    %181 = vmatpush.bf16.msra.mxu0 %v148
    %182 = vmatpush.bf16.msra.mxu0 %v144
    %183 = vmatpush.bf16.msra.mxu0 %v140
    %184 = vmatmul.bf16.gmra.mxu0 %v174
    %v185 = vpop.f32.mrf.mxu0
    %v186 = vadd.f32 0.0, %v185
    %v187 = vpop.f32.mrf.mxu0
    %188 = vdwg.mxu0
    %189 = vmatpush.bf16.msra.mxu0 0
    %190 = vmatpush.bf16.msra.mxu0 0
    %191 = vmatpush.bf16.msra.mxu0 0
    %192 = vmatpush.bf16.msra.mxu0 0
    %193 = vmatpush.bf16.msra.mxu0 %v153
    %194 = vmatpush.bf16.msra.mxu0 %v149
    %195 = vmatpush.bf16.msra.mxu0 %v145
    %196 = vmatpush.bf16.msra.mxu0 %v141
    %197 = vmatmul.bf16.gmra.mxu0 %v174
    %v198 = vpop.f32.mrf.mxu0
    %v199 = vadd.f32 0.0, %v198
    %v200 = vpop.f32.mrf.mxu0
    %201 = vdwg.mxu0
    %202 = vmatpush.bf16.msra.mxu0 0
    %203 = vmatpush.bf16.msra.mxu0 0
    %204 = vmatpush.bf16.msra.mxu0 0
    %205 = vmatpush.bf16.msra.mxu0 0
    %206 = vmatpush.bf16.msra.mxu0 %v154
    %207 = vmatpush.bf16.msra.mxu0 %v150
    %208 = vmatpush.bf16.msra.mxu0 %v146
    %209 = vmatpush.bf16.msra.mxu0 %v142
    %210 = vmatmul.bf16.gmra.mxu0 %v174
    %v211 = vpop.f32.mrf.mxu0
    %v212 = vadd.f32 0.0, %v211
    %v213 = vpop.f32.mrf.mxu0
    %214 = vdwg.mxu0
    %215 = vmatpush.bf16.msra.mxu0 0
    %216 = vmatpush.bf16.msra.mxu0 0
    %217 = vmatpush.bf16.msra.mxu0 0
    %218 = vmatpush.bf16.msra.mxu0 0
    %219 = vmatpush.bf16.msra.mxu0 %v155
    %220 = vmatpush.bf16.msra.mxu0 %v151
    %221 = vmatpush.bf16.msra.mxu0 %v147
    %222 = vmatpush.bf16.msra.mxu0 %v143
    %223 = vmatmul.bf16.gmra.mxu0 %v174
    %v224 = vpop.f32.mrf.mxu0
    %v225 = vadd.f32 0.0, %v224
    %v226 = vpop.f32.mrf.mxu0
    %227 = vdwg.mxu0
    %p228 = scmp.eq.s32.totalorder 0, 0
    // Predicated region
    $region42: #{neural_network_basic.1} parent=1 // pred_check
      %p229 = pneg %p228
    $region43: #{neural_network_basic.1} parent=1 // pred_check_branch
      %231 = sbr.rel (%p229) target = $region45
    $region44: #{neural_network_basic.1} parent=1 // pred_region
      %232 = vst [vmem:[#allocation2] sm:$0xff] %v186
      %233 = vst [vmem:[#allocation2 + $0x8] sm:$0xff] %v199
      %234 = vst [vmem:[#allocation2 + $0x10] sm:$0xff] %v212
      %235 = vst [vmem:[#allocation2 + $0x18] sm:$0xff] %v225
    $region45: #{neural_network_basic.1} parent=1 // pred_fallthru
      _
    %p236 = scmp.gt.s32.totalorder 0, 0
    // Predicated region
    $region46: #{neural_network_basic.1} parent=1 // pred_check
      %p237 = pneg %p236
    $region47: #{neural_network_basic.1} parent=1 // pred_check_branch
      %239 = sbr.rel (%p237) target = $region49
    $region48: #{neural_network_basic.1} parent=1 // pred_region
      %v240 = vld [vmem:[#allocation2] sm:$0xff]
      %v241 = vld [vmem:[#allocation2 + $0x8] sm:$0xff]
      %v242 = vld [vmem:[#allocation2 + $0x10] sm:$0xff]
      %v243 = vld [vmem:[#allocation2 + $0x18] sm:$0xff]
      %v244 = vadd.f32 %v240, %v186
      %v245 = vadd.f32 %v241, %v199
      %v246 = vadd.f32 %v242, %v212
      %v247 = vadd.f32 %v243, %v225
      %248 = vst [vmem:[#allocation2] sm:$0xff] %v244
      %249 = vst [vmem:[#allocation2 + $0x8] sm:$0xff] %v245
      %250 = vst [vmem:[#allocation2 + $0x10] sm:$0xff] %v246
      %251 = vst [vmem:[#allocation2 + $0x18] sm:$0xff] %v247
    $region49: #{neural_network_basic.1} parent=1 // pred_fallthru
      _
    // Predicated region
    $region50: #{neural_network_basic.1} parent=1 // pred_check
      %p252 = pneg %p228
    $region51: #{neural_network_basic.1} parent=1 // pred_check_branch
      %254 = sbr.rel (%p252) target = $region53
    $region52: #{neural_network_basic.1} parent=1 // pred_region
      %v255 = vld [vmem:[#allocation2] sm:$0xff]
      %v256 = vld [vmem:[#allocation2 + $0x8] sm:$0xff]
      %v257 = vld [vmem:[#allocation2 + $0x10] sm:$0xff]
      %v258 = vld [vmem:[#allocation2 + $0x18] sm:$0xff]
      %v259 = vld [vmem:[%s2] sm:$0xf]
      %v261 = vperm.slane %v259, 0
      %v262 = vperm.slane %v259, 1
      %v263 = vperm.slane %v259, 2
      %v264 = vperm.slane %v259, 3
      %v269 = vadd.f32 %v255, %v261
      %v270 = vadd.f32 %v256, %v262
      %v271 = vadd.f32 %v257, %v263
      %v272 = vadd.f32 %v258, %v264
      %v273 = vmax.f32 %v269, 0.0
      %v274 = vmax.f32 %v270, 0.0
      %v275 = vmax.f32 %v271, 0.0
      %v276 = vmax.f32 %v272, 0.0
      %v277 = vpack.c.bf16 %v273, %v273
      %v278 = vpack.c.bf16 %v274, %v274
      %v279 = vpack.c.bf16 %v275, %v275
      %v280 = vpack.c.bf16 %v276, %v276
      %v281 = vld [vmem:[#allocation5] sm:$0xf]
      %v282 = vld [vmem:[#allocation5 + $0x4] sm:$0xf]
      %v283 = vld [vmem:[#allocation5 + $0x8] sm:$0xf]
      %v284 = vld [vmem:[#allocation5 + $0xc] sm:$0xf]
      %v285 = vld [vmem:[#allocation5 + $0x10] sm:$0xf]
      %v286 = vld [vmem:[#allocation5 + $0x14] sm:$0xf]
      %v287 = vld [vmem:[#allocation5 + $0x18] sm:$0xf]
      %v288 = vld [vmem:[#allocation5 + $0x1c] sm:$0xf]
      %v289 = vld [vmem:[#allocation5 + $0x20] sm:$0xf]
      %v290 = vld [vmem:[#allocation5 + $0x24] sm:$0xf]
      %v291 = vld [vmem:[#allocation5 + $0x28] sm:$0xf]
      %v292 = vld [vmem:[#allocation5 + $0x2c] sm:$0xf]
      %v293 = vld [vmem:[#allocation5 + $0x30] sm:$0xf]
      %v294 = vld [vmem:[#allocation5 + $0x34] sm:$0xf]
      %v295 = vld [vmem:[#allocation5 + $0x38] sm:$0xf]
      %v296 = vld [vmem:[#allocation5 + $0x3c] sm:$0xf]
      %v297 = vld [vmem:[#allocation5 + $0x40] sm:$0xf]
      %v298 = vld [vmem:[#allocation5 + $0x44] sm:$0xf]
      %v299 = vld [vmem:[#allocation5 + $0x48] sm:$0xf]
      %v300 = vld [vmem:[#allocation5 + $0x4c] sm:$0xf]
      %v301 = vld [vmem:[#allocation5 + $0x50] sm:$0xf]
      %v302 = vld [vmem:[#allocation5 + $0x54] sm:$0xf]
      %v303 = vld [vmem:[#allocation5 + $0x58] sm:$0xf]
      %v304 = vld [vmem:[#allocation5 + $0x5c] sm:$0xf]
      %v305 = vld [vmem:[#allocation5 + $0x60] sm:$0xf]
      %v306 = vld [vmem:[#allocation5 + $0x64] sm:$0xf]
      %v307 = vld [vmem:[#allocation5 + $0x68] sm:$0xf]
      %v308 = vld [vmem:[#allocation5 + $0x6c] sm:$0xf]
      %v309 = vld [vmem:[#allocation5 + $0x70] sm:$0xf]
      %v310 = vld [vmem:[#allocation5 + $0x74] sm:$0xf]
      %v311 = vld [vmem:[#allocation5 + $0x78] sm:$0xf]
      %v312 = vld [vmem:[#allocation5 + $0x7c] sm:$0xf]
      %v313 = vld [vmem:[#allocation5 + $0x80] sm:$0xf]
      %v314 = vld [vmem:[#allocation5 + $0x84] sm:$0xf]
      %v315 = vld [vmem:[#allocation5 + $0x88] sm:$0xf]
      %v316 = vld [vmem:[#allocation5 + $0x8c] sm:$0xf]
      %v317 = vld [vmem:[#allocation5 + $0x90] sm:$0xf]
      %v318 = vld [vmem:[#allocation5 + $0x94] sm:$0xf]
      %v319 = vld [vmem:[#allocation5 + $0x98] sm:$0xf]
      %v320 = vld [vmem:[#allocation5 + $0x9c] sm:$0xf]
      %v321 = vld [vmem:[#allocation5 + $0xa0] sm:$0xf]
      %v322 = vld [vmem:[#allocation5 + $0xa4] sm:$0xf]
      %v323 = vld [vmem:[#allocation5 + $0xa8] sm:$0xf]
      %v324 = vld [vmem:[#allocation5 + $0xac] sm:$0xf]
      %v325 = vld [vmem:[#allocation5 + $0xb0] sm:$0xf]
      %v326 = vld [vmem:[#allocation5 + $0xb4] sm:$0xf]
      %v327 = vld [vmem:[#allocation5 + $0xb8] sm:$0xf]
      %v328 = vld [vmem:[#allocation5 + $0xbc] sm:$0xf]
      %v329 = vld [vmem:[#allocation5 + $0xc0] sm:$0xf]
      %v330 = vld [vmem:[#allocation5 + $0xc4] sm:$0xf]
      %v331 = vld [vmem:[#allocation5 + $0xc8] sm:$0xf]
      %v332 = vld [vmem:[#allocation5 + $0xcc] sm:$0xf]
      %v333 = vld [vmem:[#allocation5 + $0xd0] sm:$0xf]
      %v334 = vld [vmem:[#allocation5 + $0xd4] sm:$0xf]
      %v335 = vld [vmem:[#allocation5 + $0xd8] sm:$0xf]
      %v336 = vld [vmem:[#allocation5 + $0xdc] sm:$0xf]
      %v337 = vld [vmem:[#allocation5 + $0xe0] sm:$0xf]
      %v338 = vld [vmem:[#allocation5 + $0xe4] sm:$0xf]
      %v339 = vld [vmem:[#allocation5 + $0xe8] sm:$0xf]
      %v340 = vld [vmem:[#allocation5 + $0xec] sm:$0xf]
      %v341 = vld [vmem:[#allocation5 + $0xf0] sm:$0xf]
      %v342 = vld [vmem:[#allocation5 + $0xf4] sm:$0xf]
      %v343 = vld [vmem:[#allocation5 + $0xf8] sm:$0xf]
      %v344 = vld [vmem:[#allocation5 + $0xfc] sm:$0xf]
      %v345 = vld [vmem:[%s4] sm:$0x1]
      %v347 = vperm.slane %v345, 0
      %v413 = vunpack.c.l.b16 %v281
      %v414 = vunpack.c.l.b16 %v282
      %v415 = vunpack.c.l.b16 %v283
      %v416 = vunpack.c.l.b16 %v284
      %v417 = vunpack.c.l.b16 %v285
      %v418 = vunpack.c.l.b16 %v286
      %v419 = vunpack.c.l.b16 %v287
      %v420 = vunpack.c.l.b16 %v288
      %v421 = vunpack.c.l.b16 %v289
      %v422 = vunpack.c.l.b16 %v290
      %v423 = vunpack.c.l.b16 %v291
      %v424 = vunpack.c.l.b16 %v292
      %v425 = vunpack.c.l.b16 %v293
      %v426 = vunpack.c.l.b16 %v294
      %v427 = vunpack.c.l.b16 %v295
      %v428 = vunpack.c.l.b16 %v296
      %v429 = vunpack.c.l.b16 %v297
      %v430 = vunpack.c.l.b16 %v298
      %v431 = vunpack.c.l.b16 %v299
      %v432 = vunpack.c.l.b16 %v300
      %v433 = vunpack.c.l.b16 %v301
      %v434 = vunpack.c.l.b16 %v302
      %v435 = vunpack.c.l.b16 %v303
      %v436 = vunpack.c.l.b16 %v304
      %v437 = vunpack.c.l.b16 %v305
      %v438 = vunpack.c.l.b16 %v306
      %v439 = vunpack.c.l.b16 %v307
      %v440 = vunpack.c.l.b16 %v308
      %v441 = vunpack.c.l.b16 %v309
      %v442 = vunpack.c.l.b16 %v310
      %v443 = vunpack.c.l.b16 %v311
      %v444 = vunpack.c.l.b16 %v312
      %v445 = vunpack.c.l.b16 %v313
      %v446 = vunpack.c.l.b16 %v314
      %v447 = vunpack.c.l.b16 %v315
      %v448 = vunpack.c.l.b16 %v316
      %v449 = vunpack.c.l.b16 %v317
      %v450 = vunpack.c.l.b16 %v318
      %v451 = vunpack.c.l.b16 %v319
      %v452 = vunpack.c.l.b16 %v320
      %v453 = vunpack.c.l.b16 %v321
      %v454 = vunpack.c.l.b16 %v322
      %v455 = vunpack.c.l.b16 %v323
      %v456 = vunpack.c.l.b16 %v324
      %v457 = vunpack.c.l.b16 %v325
      %v458 = vunpack.c.l.b16 %v326
      %v459 = vunpack.c.l.b16 %v327
      %v460 = vunpack.c.l.b16 %v328
      %v461 = vunpack.c.l.b16 %v329
      %v462 = vunpack.c.l.b16 %v330
      %v463 = vunpack.c.l.b16 %v331
      %v464 = vunpack.c.l.b16 %v332
      %v465 = vunpack.c.l.b16 %v333
      %v466 = vunpack.c.l.b16 %v334
      %v467 = vunpack.c.l.b16 %v335
      %v468 = vunpack.c.l.b16 %v336
      %v469 = vunpack.c.l.b16 %v337
      %v470 = vunpack.c.l.b16 %v338
      %v471 = vunpack.c.l.b16 %v339
      %v472 = vunpack.c.l.b16 %v340
      %v473 = vunpack.c.l.b16 %v341
      %v474 = vunpack.c.l.b16 %v342
      %v475 = vunpack.c.l.b16 %v343
      %v476 = vunpack.c.l.b16 %v344
      %v477 = vpack.c.b16 %v414, %v413
      %v478 = vpack.c.b16 %v416, %v415
      %v479 = vpack.c.b16 %v418, %v417
      %v480 = vpack.c.b16 %v420, %v419
      %v481 = vpack.c.b16 %v422, %v421
      %v482 = vpack.c.b16 %v424, %v423
      %v483 = vpack.c.b16 %v426, %v425
      %v484 = vpack.c.b16 %v428, %v427
      %v485 = vpack.c.b16 %v430, %v429
      %v486 = vpack.c.b16 %v432, %v431
      %v487 = vpack.c.b16 %v434, %v433
      %v488 = vpack.c.b16 %v436, %v435
      %v489 = vpack.c.b16 %v438, %v437
      %v490 = vpack.c.b16 %v440, %v439
      %v491 = vpack.c.b16 %v442, %v441
      %v492 = vpack.c.b16 %v444, %v443
      %v493 = vpack.c.b16 %v446, %v445
      %v494 = vpack.c.b16 %v448, %v447
      %v495 = vpack.c.b16 %v450, %v449
      %v496 = vpack.c.b16 %v452, %v451
      %v497 = vpack.c.b16 %v454, %v453
      %v498 = vpack.c.b16 %v456, %v455
      %v499 = vpack.c.b16 %v458, %v457
      %v500 = vpack.c.b16 %v460, %v459
      %v501 = vpack.c.b16 %v462, %v461
      %v502 = vpack.c.b16 %v464, %v463
      %v503 = vpack.c.b16 %v466, %v465
      %v504 = vpack.c.b16 %v468, %v467
      %v505 = vpack.c.b16 %v470, %v469
      %v506 = vpack.c.b16 %v472, %v471
      %v507 = vpack.c.b16 %v474, %v473
      %v508 = vpack.c.b16 %v476, %v475
      %541 = vmatpush.bf16.msra.mxu0 %v484
      %542 = vmatpush.bf16.msra.mxu0 %v483
      %543 = vmatpush.bf16.msra.mxu0 %v482
      %544 = vmatpush.bf16.msra.mxu0 %v481
      %545 = vmatpush.bf16.msra.mxu0 %v480
      %546 = vmatpush.bf16.msra.mxu0 %v479
      %547 = vmatpush.bf16.msra.mxu0 %v478
      %548 = vmatpush.bf16.msra.mxu0 %v477
      %549 = vmatmul.bf16.gmra.mxu0 %v277
      %v550 = vpop.f32.mrf.mxu0
      %v551 = vadd.f32 %v347, %v550
      %v552 = vpop.f32.mrf.mxu0
      %553 = vdwg.mxu0
      %554 = vmatpush.bf16.msra.mxu0 %v492
      %555 = vmatpush.bf16.msra.mxu0 %v491
      %556 = vmatpush.bf16.msra.mxu0 %v490
      %557 = vmatpush.bf16.msra.mxu0 %v489
      %558 = vmatpush.bf16.msra.mxu0 %v488
      %559 = vmatpush.bf16.msra.mxu0 %v487
      %560 = vmatpush.bf16.msra.mxu0 %v486
      %561 = vmatpush.bf16.msra.mxu0 %v485
      %562 = vmatmul.bf16.gmra.mxu0 %v278
      %v563 = vpop.f32.mrf.mxu0
      %v564 = vadd.f32 %v551, %v563
      %v565 = vpop.f32.mrf.mxu0
      %566 = vdwg.mxu0
      %567 = vmatpush.bf16.msra.mxu0 %v500
      %568 = vmatpush.bf16.msra.mxu0 %v499
      %569 = vmatpush.bf16.msra.mxu0 %v498
      %570 = vmatpush.bf16.msra.mxu0 %v497
      %571 = vmatpush.bf16.msra.mxu0 %v496
      %572 = vmatpush.bf16.msra.mxu0 %v495
      %573 = vmatpush.bf16.msra.mxu0 %v494
      %574 = vmatpush.bf16.msra.mxu0 %v493
      %575 = vmatmul.bf16.gmra.mxu0 %v279
      %v576 = vpop.f32.mrf.mxu0
      %v577 = vadd.f32 %v564, %v576
      %v578 = vpop.f32.mrf.mxu0
      %579 = vdwg.mxu0
      %580 = vmatpush.bf16.msra.mxu0 %v508
      %581 = vmatpush.bf16.msra.mxu0 %v507
      %582 = vmatpush.bf16.msra.mxu0 %v506
      %583 = vmatpush.bf16.msra.mxu0 %v505
      %584 = vmatpush.bf16.msra.mxu0 %v504
      %585 = vmatpush.bf16.msra.mxu0 %v503
      %586 = vmatpush.bf16.msra.mxu0 %v502
      %587 = vmatpush.bf16.msra.mxu0 %v501
      %588 = vmatmul.bf16.gmra.mxu0 %v280
      %v589 = vpop.f32.mrf.mxu0
      %v590 = vadd.f32 %v577, %v589
      %v591 = vpop.f32.mrf.mxu0
      %592 = vdwg.mxu0
      %v593 = vmax.f32 %v590, 0.0
      %v594 = vpack.c.bf16 %v593, %v593
      %v595 = vld [vmem:[#allocation7] sm:$0xf]
      %v596 = vld [vmem:[#allocation7 + $0x4] sm:$0xf]
      %v597 = vld [vmem:[#allocation7 + $0x8] sm:$0xf]
      %v598 = vld [vmem:[#allocation7 + $0xc] sm:$0xf]
      %v599 = vld [vmem:[#allocation7 + $0x10] sm:$0xf]
      %v600 = vld [vmem:[#allocation7 + $0x14] sm:$0xf]
      %v601 = vld [vmem:[#allocation7 + $0x18] sm:$0xf]
      %v602 = vld [vmem:[#allocation7 + $0x1c] sm:$0xf]
      %v603 = vld [vmem:[#allocation7 + $0x20] sm:$0xf]
      %v604 = vld [vmem:[#allocation7 + $0x24] sm:$0xf]
      %v605 = vld [vmem:[#allocation7 + $0x28] sm:$0xf]
      %v606 = vld [vmem:[#allocation7 + $0x2c] sm:$0xf]
      %v607 = vld [vmem:[#allocation7 + $0x30] sm:$0xf]
      %v608 = vld [vmem:[#allocation7 + $0x34] sm:$0xf]
      %v609 = vld [vmem:[#allocation7 + $0x38] sm:$0xf]
      %v610 = vld [vmem:[#allocation7 + $0x3c] sm:$0xf]
      %v611 = vld [vmem:[%s6] sm:$0x1]
      %v613 = vperm.slane %v611, 0
      %v631 = vunpack.c.l.b16 %v595
      %v632 = vunpack.c.l.b16 %v596
      %v633 = vunpack.c.l.b16 %v597
      %v634 = vunpack.c.l.b16 %v598
      %v635 = vunpack.c.l.b16 %v599
      %v636 = vunpack.c.l.b16 %v600
      %v637 = vunpack.c.l.b16 %v601
      %v638 = vunpack.c.l.b16 %v602
      %v639 = vunpack.c.l.b16 %v603
      %v640 = vunpack.c.l.b16 %v604
      %v641 = vunpack.c.l.b16 %v605
      %v642 = vunpack.c.l.b16 %v606
      %v643 = vunpack.c.l.b16 %v607
      %v644 = vunpack.c.l.b16 %v608
      %v645 = vunpack.c.l.b16 %v609
      %v646 = vunpack.c.l.b16 %v610
      %v647 = vpack.c.b16 %v632, %v631
      %v648 = vpack.c.b16 %v634, %v633
      %v649 = vpack.c.b16 %v636, %v635
      %v650 = vpack.c.b16 %v638, %v637
      %v651 = vpack.c.b16 %v640, %v639
      %v652 = vpack.c.b16 %v642, %v641
      %v653 = vpack.c.b16 %v644, %v643
      %v654 = vpack.c.b16 %v646, %v645
      %663 = vmatpush.bf16.msra.mxu0 %v654
      %664 = vmatpush.bf16.msra.mxu0 %v653
      %665 = vmatpush.bf16.msra.mxu0 %v652
      %666 = vmatpush.bf16.msra.mxu0 %v651
      %667 = vmatpush.bf16.msra.mxu0 %v650
      %668 = vmatpush.bf16.msra.mxu0 %v649
      %669 = vmatpush.bf16.msra.mxu0 %v648
      %670 = vmatpush.bf16.msra.mxu0 %v647
      %671 = vmatmul.bf16.gmra.mxu0 %v594
      %v672 = vpop.f32.mrf.mxu0
      %v673 = vadd.f32 %v613, %v672
      %v674 = vpop.f32.mrf.mxu0
      %675 = vdwg.mxu0
      %676 = vst [vmem:[%s7] sm:$0xff] %v673
    $region53: #{neural_network_basic.1} parent=1 // pred_fallthru
      _
    // Predicated region
    $region54: #{neural_network_basic.1} parent=1 // pred_check
      _
    $region55: #{neural_network_basic.1} parent=1 // pred_check_branch
      %678 = sbr.rel (0) target = $region57
    $region56: #{neural_network_basic.1} parent=1 // pred_region
      _
    $region57: #{neural_network_basic.1} parent=1 // pred_fallthru
      _
    // Predicated region
    $region58: #{neural_network_basic.1} parent=1 // pred_check
      _
    $region59: #{neural_network_basic.1} parent=1 // pred_check_branch
      %680 = sbr.rel (0) target = $region61
    $region60: #{neural_network_basic.1} parent=1 // pred_region
      _
    $region61: #{neural_network_basic.1} parent=1 // pred_fallthru
      _
    %681 = vsyncpa [#allocation4], 1
    %682 = vsyncpa [#allocation6], 1

</llo_original>
